<compile_context>
chip_gen: v6e
topology: v6e:2x2x1
jax: 0.10.0
libtpu: 0.0.40
codegen_flags: <defaults>
</compile_context>

<pallas_src>
import jax
import jax.numpy as jnp
from jax.experimental import pallas as pl
from jax.experimental.pallas import tpu as pltpu

OBS_DIM = 16      # env.observation_space.n (synthetic small value)
HIDDEN = 32
ACTION_DIM = 5
LANES = 128       # lane-dense padded output width
BATCH = 256       # rows per call (amortizes launch overhead; multiple of 8)
MAX_TILE = 1024   # row-tile cap for large batches (still < 2 MiB VMEM double-buffered)

NEG_BIG = -1e30   # bias value for padded lanes -> exp underflows to exactly 0


def _round_up(n, m):
    return ((n + m - 1) // m) * m


def policy_kernel(x_ref, w_ref, b_ref, out_ref):
    """One fused (folded) matmul + bias + numerically-stable softmax over 128 lanes."""
    logits = (
        jnp.dot(x_ref[...], w_ref[...], preferred_element_type=jnp.float32)
        + b_ref[...]
    )
    m = jnp.max(logits, axis=-1, keepdims=True)
    e = jnp.exp(logits - m)
    inv = pl.reciprocal(jnp.sum(e, axis=-1, keepdims=True), approx=False)
    out_ref[...] = (e * inv).astype(out_ref.dtype)


@jax.jit
def policy_forward(x, w_fold, b_fold):
    """x: (B, OBS_DIM) f32 -> action_prob: (B, ACTION_DIM) f32.

    w_fold: (OBS_DIM, LANES) folded+padded weight, b_fold: (1, LANES) folded+padded bias.
    """
    B = x.shape[0]
    b_pad8 = _round_up(B, 8)                  # sublane alignment
    if b_pad8 <= MAX_TILE:
        tb = b_pad8                           # whole batch in ONE grid step
        b_pad = b_pad8
    else:
        tb = MAX_TILE                         # large-B path: big tiles, real pipeline
        b_pad = _round_up(B, tb)
    if b_pad != B:
        x = jnp.pad(x, ((0, b_pad - B), (0, 0)))

    n_steps = b_pad // tb
    # 2-TC split only pays off when there are multiple sizable steps (v7x, large B);
    # single-step stays on one TensorCore.
    dim_sem = ("parallel",) if n_steps > 1 else ("arbitrary",)

    out = pl.pallas_call(
        policy_kernel,
        out_shape=jax.ShapeDtypeStruct((b_pad, LANES), jnp.float32),
        grid=(n_steps,),
        in_specs=[
            pl.BlockSpec((tb, OBS_DIM), lambda i: (i, 0)),     # batch-tiled input
            pl.BlockSpec((OBS_DIM, LANES), lambda i: (0, 0)),  # weights: VMEM-resident
            pl.BlockSpec((1, LANES), lambda i: (0, 0)),        # bias: VMEM-resident
        ],
        out_specs=pl.BlockSpec((tb, LANES), lambda i: (i, 0)),
        compiler_params=pltpu.CompilerParams(
            dimension_semantics=dim_sem,
        ),
    )(x, w_fold, b_fold)

    return out[:B, :ACTION_DIM]


def init_params(key):
    """Deterministic synthetic params; weights stored (in, out), biases (1, out)."""
    ks = jax.random.split(key, 6)

    def lin(kw, kb, fan_in, fan_out):
        bound = 1.0 / jnp.sqrt(fan_in)
        w = jax.random.uniform(kw, (fan_in, fan_out), jnp.float32, -bound, bound)
        b = jax.random.uniform(kb, (1, fan_out), jnp.float32, -bound, bound)
        return w, b

    w1, b1 = lin(ks[0], ks[1], OBS_DIM, HIDDEN)
    w2, b2 = lin(ks[2], ks[3], HIDDEN, HIDDEN)
    wh, bh = lin(ks[4], ks[5], HIDDEN, ACTION_DIM)
    return (w1, b1, w2, b2, wh, bh)


def fold_params(params):
    """Collapse affine1 -> affine2 -> action_head (no activations) into one affine,
    padded to 128 output lanes (pure glue; done once at construction time)."""
    w1, b1, w2, b2, wh, bh = params
    w_fold = w1 @ w2 @ wh                       # (OBS_DIM, ACTION_DIM)
    b_fold = (b1 @ w2 + b2) @ wh + bh           # (1, ACTION_DIM)

    w_pad = jnp.zeros((OBS_DIM, LANES), jnp.float32).at[:, :ACTION_DIM].set(w_fold)
    b_pad = jnp.full((1, LANES), NEG_BIG, jnp.float32).at[:, :ACTION_DIM].set(b_fold)
    return w_pad, b_pad


def reference_forward(x, params):
    """Plain-JAX reference of the ORIGINAL (unfolded) 3-layer math."""
    w1, b1, w2, b2, wh, bh = params
    h = x @ w1 + b1
    h = h @ w2 + b2
    logits = h @ wh + bh
    return jax.nn.softmax(logits, axis=-1)


if __name__ == "__main__":
    key = jax.random.PRNGKey(0)
    kx, kp = jax.random.split(key)
    x = jax.random.normal(kx, (BATCH, OBS_DIM), jnp.float32)
    params = init_params(kp)
    w_fold, b_fold = fold_params(params)

    out = policy_forward(x, w_fold, b_fold)
    out = jax.block_until_ready(out)

    ref = reference_forward(x, params)
    assert out.shape == (BATCH, ACTION_DIM)
    assert jnp.allclose(out, ref, atol=1e-5, rtol=1e-5)
    # rows of a softmax must sum to 1 (padded lanes contribute exactly 0)
    assert jnp.allclose(jnp.sum(out, axis=-1), jnp.ones((BATCH,)), atol=1e-5)

    print("KERNEL_OK")
</pallas_src>

<mosaic_0001>
module attributes {stable_mosaic.version = 11 : i64} {
  func.func @policy_kernel(%arg0: i32, %arg1: memref<256x16xf32, #tpu.memory_space<vmem>>, %arg2: memref<16x128xf32, #tpu.memory_space<vmem>>, %arg3: memref<1x128xf32, #tpu.memory_space<vmem>>, %arg4: memref<256x128xf32, #tpu.memory_space<vmem>>) attributes {dimension_semantics = [#tpu.dimension_semantics<arbitrary>], iteration_bounds = array<i64: 1>, scalar_prefetch = 0 : i64, scratch_operands = 0 : i64, tpu.core_type = #tpu.core_type<tc>, window_params = [{transform_indices = @transform_0, window_bounds = array<i64: 256, 16>}, {pipeline_mode = #tpu.pipeline_mode<synchronous>, transform_indices = @transform_1, window_bounds = array<i64: 16, 128>}, {pipeline_mode = #tpu.pipeline_mode<synchronous>, transform_indices = @transform_2, window_bounds = array<i64: 1, 128>}, {transform_indices = @transform_3, window_bounds = array<i64: 256, 128>}]} {
    %c0 = arith.constant 0 : index
    %c0_0 = arith.constant 0 : index
    %0 = vector.load %arg1[%c0, %c0_0] : memref<256x16xf32, #tpu.memory_space<vmem>>, vector<256x16xf32>
    %c0_1 = arith.constant 0 : index
    %c0_2 = arith.constant 0 : index
    %1 = vector.load %arg2[%c0_1, %c0_2] : memref<16x128xf32, #tpu.memory_space<vmem>>, vector<16x128xf32>
    %cst = arith.constant dense<0.000000e+00> : vector<256x128xf32>
    %2 = tpu.matmul %0, %1, %cst {dimension_numbers = #tpu.dot_dimension_numbers<[1], [0], [0], [1], [0, 0, 1, 1], [], []>} : vector<256x16xf32>, vector<16x128xf32>, vector<256x128xf32> -> vector<256x128xf32>
    %c0_3 = arith.constant 0 : index
    %c0_4 = arith.constant 0 : index
    %3 = vector.load %arg3[%c0_3, %c0_4] : memref<1x128xf32, #tpu.memory_space<vmem>>, vector<1x128xf32>
    %4 = vector.broadcast %3 : vector<1x128xf32> to vector<256x128xf32>
    %5 = arith.addf %2, %4 : vector<256x128xf32>
    %cst_5 = arith.constant dense<0xFF800000> : vector<256xf32>
    %6 = vector.multi_reduction <maximumf>, %5, %cst_5 [1] : vector<256x128xf32> to vector<256xf32>
    %7 = vector.shape_cast %6 : vector<256xf32> to vector<256x1xf32>
    %8 = vector.broadcast %7 : vector<256x1xf32> to vector<256x128xf32>
    %9 = arith.subf %5, %8 : vector<256x128xf32>
    %10 = math.exp %9 : vector<256x128xf32>
    %cst_6 = arith.constant dense<0.000000e+00> : vector<256xf32>
    %11 = vector.multi_reduction <add>, %10, %cst_6 [1] : vector<256x128xf32> to vector<256xf32>
    %12 = vector.shape_cast %11 : vector<256xf32> to vector<256x1xf32>
    %13 = tpu.reciprocal %12 : vector<256x1xf32> -> vector<256x1xf32>
    %14 = vector.broadcast %13 : vector<256x1xf32> to vector<256x128xf32>
    %15 = arith.mulf %10, %14 : vector<256x128xf32>
    %c0_7 = arith.constant 0 : index
    %c0_8 = arith.constant 0 : index
    %16 = vector.load %arg4[%c0_7, %c0_8] : memref<256x128xf32, #tpu.memory_space<vmem>>, vector<256x128xf32>
    tpu.vector_store %arg4[%c0_7, %c0_8], %15 {strides = array<i32>} : memref<256x128xf32, #tpu.memory_space<vmem>>, vector<256x128xf32>,
    return
  }
  func.func @transform_0(%arg0: i32) -> (i32, i32) {
    %c0_i32 = arith.constant 0 : i32
    %c0_i32_0 = arith.constant 0 : i32
    return %arg0, %c0_i32 : i32, i32
  }
  func.func @transform_1(%arg0: i32) -> (i32, i32) {
    %c0_i32 = arith.constant 0 : i32
    %c0_i32_0 = arith.constant 0 : i32
    %c0_i32_1 = arith.constant 0 : i32
    return %c0_i32, %c0_i32_0 : i32, i32
  }
  func.func @transform_2(%arg0: i32) -> (i32, i32) {
    %c0_i32 = arith.constant 0 : i32
    %c0_i32_0 = arith.constant 0 : i32
    %c0_i32_1 = arith.constant 0 : i32
    return %c0_i32, %c0_i32_0 : i32, i32
  }
  func.func @transform_3(%arg0: i32) -> (i32, i32) {
    %c0_i32 = arith.constant 0 : i32
    %c0_i32_0 = arith.constant 0 : i32
    return %arg0, %c0_i32 : i32, i32
  }
}

</mosaic_0001>

<llo_original>
// kernel: policy_forward.1
$region0: #{policy_forward.1}
  #allocation0 [shape = 'u32[]', space=smem, size = 0x4, offset = 0x4, fixed_abs, tag = 'smem constant byte address 0x4 - core index']
  #allocation1 [shape = 'u32[144,128]{1,0:T(1,128)}', space=vmem, size = 0x12000, scoped, tag = 'internal scratch']
  %s0 = inlined_call_operand.vmem [shape: f32[256,16], index: 0, kind: input, shape index: {}]
  %s1 = inlined_call_operand.vmem [shape: f32[16,128], index: 1, kind: input, shape index: {}]
  %s2 = inlined_call_operand.vmem [shape: f32[1,128], index: 2, kind: input, shape index: {}]
  %s3 = inlined_call_operand.vmem [shape: f32[256,128], index: 3, kind: output, shape index: {}]
  %s4 = sld [smem:[#allocation0]]
  $region22: #{policy_forward.1} parent=0
    _
  %s6 = ssub.s32 1, %s4
  %s7 = scalar_select 0, %s6, %s4
  // Predicated region
  $region2: #{policy_forward.1} parent=0 // pred_check
    _
  $region3: #{policy_forward.1} parent=0 // pred_check_branch
    %9 = sbr.rel (0) target = $region5
  $region4: #{policy_forward.1} parent=0 // pred_region
    _
  $region5: #{policy_forward.1} parent=0 // pred_fallthru
    _
  // Predicated region
  $region6: #{policy_forward.1} parent=0 // pred_check
    _
  $region7: #{policy_forward.1} parent=0 // pred_check_branch
    %11 = sbr.rel (0) target = $region9
  $region8: #{policy_forward.1} parent=0 // pred_region
    _
  $region9: #{policy_forward.1} parent=0 // pred_fallthru
    _
  // Predicated region
  $region10: #{policy_forward.1} parent=0 // pred_check
    _
  $region11: #{policy_forward.1} parent=0 // pred_check_branch
    %13 = sbr.rel (0) target = $region13
  $region12: #{policy_forward.1} parent=0 // pred_region
    _
  $region13: #{policy_forward.1} parent=0 // pred_fallthru
    _
  %v14 = vld [vmem:[%s0] sm:$0xff]
  %v15 = vld [vmem:[%s0 + $0x8] sm:$0xff]
  %v16 = vld [vmem:[%s0 + $0x10] sm:$0xff]
  %v17 = vld [vmem:[%s0 + $0x18] sm:$0xff]
  %v18 = vld [vmem:[%s0 + $0x20] sm:$0xff]
  %v19 = vld [vmem:[%s0 + $0x28] sm:$0xff]
  %v20 = vld [vmem:[%s0 + $0x30] sm:$0xff]
  %v21 = vld [vmem:[%s0 + $0x38] sm:$0xff]
  %v22 = vld [vmem:[%s0 + $0x40] sm:$0xff]
  %v23 = vld [vmem:[%s0 + $0x48] sm:$0xff]
  %v24 = vld [vmem:[%s0 + $0x50] sm:$0xff]
  %v25 = vld [vmem:[%s0 + $0x58] sm:$0xff]
  %v26 = vld [vmem:[%s0 + $0x60] sm:$0xff]
  %v27 = vld [vmem:[%s0 + $0x68] sm:$0xff]
  %v28 = vld [vmem:[%s0 + $0x70] sm:$0xff]
  %v29 = vld [vmem:[%s0 + $0x78] sm:$0xff]
  %v30 = vld [vmem:[%s0 + $0x80] sm:$0xff]
  %v31 = vld [vmem:[%s0 + $0x88] sm:$0xff]
  %v32 = vld [vmem:[%s0 + $0x90] sm:$0xff]
  %v33 = vld [vmem:[%s0 + $0x98] sm:$0xff]
  %v34 = vld [vmem:[%s0 + $0xa0] sm:$0xff]
  %v35 = vld [vmem:[%s0 + $0xa8] sm:$0xff]
  %v36 = vld [vmem:[%s0 + $0xb0] sm:$0xff]
  %v37 = vld [vmem:[%s0 + $0xb8] sm:$0xff]
  %v38 = vld [vmem:[%s0 + $0xc0] sm:$0xff]
  %v39 = vld [vmem:[%s0 + $0xc8] sm:$0xff]
  %v40 = vld [vmem:[%s0 + $0xd0] sm:$0xff]
  %v41 = vld [vmem:[%s0 + $0xd8] sm:$0xff]
  %v42 = vld [vmem:[%s0 + $0xe0] sm:$0xff]
  %v43 = vld [vmem:[%s0 + $0xe8] sm:$0xff]
  %v44 = vld [vmem:[%s0 + $0xf0] sm:$0xff]
  %v45 = vld [vmem:[%s0 + $0xf8] sm:$0xff]
  %v46 = vld [vmem:[%s1] sm:$0xff]
  %v47 = vld [vmem:[%s1 + $0x8] sm:$0xff]
  %v48 = vld [vmem:[%s2] sm:$0x1]
  %v50 = vlaneseq
  %v51 = vshrl.u32 %v50, 7
  %v52 = vsub.s32 0, %v51
  %v53 = vrot.slane %v48, %v52
  %vm55 = vcmask 130048
  %v57 = vsel %vm55, %v14, 0
  %v60 = vsel %vm55, %v15, 0
  %v63 = vsel %vm55, %v16, 0
  %v66 = vsel %vm55, %v17, 0
  %v69 = vsel %vm55, %v18, 0
  %v72 = vsel %vm55, %v19, 0
  %v75 = vsel %vm55, %v20, 0
  %v78 = vsel %vm55, %v21, 0
  %v81 = vsel %vm55, %v22, 0
  %v84 = vsel %vm55, %v23, 0
  %v87 = vsel %vm55, %v24, 0
  %v90 = vsel %vm55, %v25, 0
  %v93 = vsel %vm55, %v26, 0
  %v96 = vsel %vm55, %v27, 0
  %v99 = vsel %vm55, %v28, 0
  %v102 = vsel %vm55, %v29, 0
  %v105 = vsel %vm55, %v30, 0
  %v108 = vsel %vm55, %v31, 0
  %v111 = vsel %vm55, %v32, 0
  %v114 = vsel %vm55, %v33, 0
  %v117 = vsel %vm55, %v34, 0
  %v120 = vsel %vm55, %v35, 0
  %v123 = vsel %vm55, %v36, 0
  %v126 = vsel %vm55, %v37, 0
  %v129 = vsel %vm55, %v38, 0
  %v132 = vsel %vm55, %v39, 0
  %v135 = vsel %vm55, %v40, 0
  %v138 = vsel %vm55, %v41, 0
  %v141 = vsel %vm55, %v42, 0
  %v144 = vsel %vm55, %v43, 0
  %v147 = vsel %vm55, %v44, 0
  %v150 = vsel %vm55, %v45, 0
  %152 = vmatprep.subr.mxu0 0.0
  %153 = vmatpush1.msra.mxu0 0.0
  %154 = vmatprep.subr.mxu0 0.0
  %155 = vmatpush1.msra.mxu0 0.0
  %156 = vmatprep.subr.mxu0 0.0
  %157 = vmatpush1.msra.mxu0 0.0
  %158 = vmatprep.subr.mxu0 0.0
  %159 = vmatpush1.msra.mxu0 0.0
  %160 = vmatprep.subr.mxu0 0.0
  %161 = vmatpush1.msra.mxu0 0.0
  %162 = vmatprep.subr.mxu0 0.0
  %163 = vmatpush1.msra.mxu0 0.0
  %164 = vmatprep.subr.mxu0 0.0
  %165 = vmatpush1.msra.mxu0 0.0
  %166 = vmatprep.subr.mxu0 0.0
  %167 = vmatpush1.msra.mxu0 0.0
  %168 = vmatprep.subr.mxu0 0.0
  %169 = vmatpush1.msra.mxu0 0.0
  %170 = vmatprep.subr.mxu0 0.0
  %171 = vmatpush1.msra.mxu0 0.0
  %172 = vmatprep.subr.mxu0 0.0
  %173 = vmatpush1.msra.mxu0 0.0
  %174 = vmatprep.subr.mxu0 0.0
  %175 = vmatpush1.msra.mxu0 0.0
  %176 = vmatprep.subr.mxu0 0.0
  %177 = vmatpush1.msra.mxu0 0.0
  %178 = vmatprep.subr.mxu0 0.0
  %179 = vmatpush1.msra.mxu0 0.0
  %180 = vmatprep.subr.mxu0 0.0
  %181 = vmatpush1.msra.mxu0 %v47
  %182 = vmatprep.subr.mxu0 0.0
  %183 = vmatpush1.msra.mxu0 %v46
  %184 = vmatprep.subr.mxu0 0.0
  %185 = vmatpush2.msra.mxu0 0.0
  %186 = vmatprep.subr.mxu0 0.0
  %187 = vmatpush2.msra.mxu0 0.0
  %188 = vmatprep.subr.mxu0 0.0
  %189 = vmatpush2.msra.mxu0 0.0
  %190 = vmatprep.subr.mxu0 0.0
  %191 = vmatpush2.msra.mxu0 0.0
  %192 = vmatprep.subr.mxu0 0.0
  %193 = vmatpush2.msra.mxu0 0.0
  %194 = vmatprep.subr.mxu0 0.0
  %195 = vmatpush2.msra.mxu0 0.0
  %196 = vmatprep.subr.mxu0 0.0
  %197 = vmatpush2.msra.mxu0 0.0
  %198 = vmatprep.subr.mxu0 0.0
  %199 = vmatpush2.msra.mxu0 0.0
  %200 = vmatprep.subr.mxu0 0.0
  %201 = vmatpush2.msra.mxu0 0.0
  %202 = vmatprep.subr.mxu0 0.0
  %203 = vmatpush2.msra.mxu0 0.0
  %204 = vmatprep.subr.mxu0 0.0
  %205 = vmatpush2.msra.mxu0 0.0
  %206 = vmatprep.subr.mxu0 0.0
  %207 = vmatpush2.msra.mxu0 0.0
  %208 = vmatprep.subr.mxu0 0.0
  %209 = vmatpush2.msra.mxu0 0.0
  %210 = vmatprep.subr.mxu0 0.0
  %211 = vmatpush2.msra.mxu0 0.0
  %212 = vmatprep.subr.mxu0 0.0
  %213 = vmatpush2.msra.mxu0 0.0
  %214 = vmatprep.subr.mxu0 0.0
  %215 = vmatpush2.msra.mxu0 0.0
  %216 = vmatprep.mubr.f32.mxu0 0.0
  %217 = vmatmul.mubr.f32.gmra.mxu0 %v57
  %v218 = vpop.f32.mrf.mxu0
  %v219 = vadd.f32 %v53, %v218
  %v220 = vpop.f32.mrf.mxu0
  %221 = vmatprep.mubr.f32.mxu0 0.0
  %222 = vmatmul.mubr.f32.gmra.mxu0 %v60
  %v223 = vpop.f32.mrf.mxu0
  %v224 = vadd.f32 %v53, %v223
  %v225 = vpop.f32.mrf.mxu0
  %226 = vmatprep.mubr.f32.mxu0 0.0
  %227 = vmatmul.mubr.f32.gmra.mxu0 %v63
  %v228 = vpop.f32.mrf.mxu0
  %v229 = vadd.f32 %v53, %v228
  %v230 = vpop.f32.mrf.mxu0
  %231 = vmatprep.mubr.f32.mxu0 0.0
  %232 = vmatmul.mubr.f32.gmra.mxu0 %v66
  %v233 = vpop.f32.mrf.mxu0
  %v234 = vadd.f32 %v53, %v233
  %v235 = vpop.f32.mrf.mxu0
  %236 = vmatprep.mubr.f32.mxu0 0.0
  %237 = vmatmul.mubr.f32.gmra.mxu0 %v69
  %v238 = vpop.f32.mrf.mxu0
  %v239 = vadd.f32 %v53, %v238
  %v240 = vpop.f32.mrf.mxu0
  %241 = vmatprep.mubr.f32.mxu0 0.0
  %242 = vmatmul.mubr.f32.gmra.mxu0 %v72
  %v243 = vpop.f32.mrf.mxu0
  %v244 = vadd.f32 %v53, %v243
  %v245 = vpop.f32.mrf.mxu0
  %246 = vmatprep.mubr.f32.mxu0 0.0
  %247 = vmatmul.mubr.f32.gmra.mxu0 %v75
  %v248 = vpop.f32.mrf.mxu0
  %v249 = vadd.f32 %v53, %v248
  %v250 = vpop.f32.mrf.mxu0
  %251 = vmatprep.mubr.f32.mxu0 0.0
  %252 = vmatmul.mubr.f32.gmra.mxu0 %v78
  %v253 = vpop.f32.mrf.mxu0
  %v254 = vadd.f32 %v53, %v253
  %v255 = vpop.f32.mrf.mxu0
  %256 = vmatprep.mubr.f32.mxu0 0.0
  %257 = vmatmul.mubr.f32.gmra.mxu0 %v81
  %v258 = vpop.f32.mrf.mxu0
  %v259 = vadd.f32 %v53, %v258
  %v260 = vpop.f32.mrf.mxu0
  %261 = vmatprep.mubr.f32.mxu0 0.0
  %262 = vmatmul.mubr.f32.gmra.mxu0 %v84
  %v263 = vpop.f32.mrf.mxu0
  %v264 = vadd.f32 %v53, %v263
  %v265 = vpop.f32.mrf.mxu0
  %266 = vmatprep.mubr.f32.mxu0 0.0
  %267 = vmatmul.mubr.f32.gmra.mxu0 %v87
  %v268 = vpop.f32.mrf.mxu0
  %v269 = vadd.f32 %v53, %v268
  %v270 = vpop.f32.mrf.mxu0
  %271 = vmatprep.mubr.f32.mxu0 0.0
  %272 = vmatmul.mubr.f32.gmra.mxu0 %v90
  %v273 = vpop.f32.mrf.mxu0
  %v274 = vadd.f32 %v53, %v273
  %v275 = vpop.f32.mrf.mxu0
  %276 = vmatprep.mubr.f32.mxu0 0.0
  %277 = vmatmul.mubr.f32.gmra.mxu0 %v93
  %v278 = vpop.f32.mrf.mxu0
  %v279 = vadd.f32 %v53, %v278
  %v280 = vpop.f32.mrf.mxu0
  %281 = vmatprep.mubr.f32.mxu0 0.0
  %282 = vmatmul.mubr.f32.gmra.mxu0 %v96
  %v283 = vpop.f32.mrf.mxu0
  %v284 = vadd.f32 %v53, %v283
  %v285 = vpop.f32.mrf.mxu0
  %286 = vmatprep.mubr.f32.mxu0 0.0
  %287 = vmatmul.mubr.f32.gmra.mxu0 %v99
  %v288 = vpop.f32.mrf.mxu0
  %v289 = vadd.f32 %v53, %v288
  %v290 = vpop.f32.mrf.mxu0
  %291 = vmatprep.mubr.f32.mxu0 0.0
  %292 = vmatmul.mubr.f32.gmra.mxu0 %v102
  %v293 = vpop.f32.mrf.mxu0
  %v294 = vadd.f32 %v53, %v293
  %v295 = vpop.f32.mrf.mxu0
  %296 = vmatprep.mubr.f32.mxu0 0.0
  %297 = vmatmul.mubr.f32.gmra.mxu0 %v105
  %v298 = vpop.f32.mrf.mxu0
  %v299 = vadd.f32 %v53, %v298
  %v300 = vpop.f32.mrf.mxu0
  %301 = vmatprep.mubr.f32.mxu0 0.0
  %302 = vmatmul.mubr.f32.gmra.mxu0 %v108
  %v303 = vpop.f32.mrf.mxu0
  %v304 = vadd.f32 %v53, %v303
  %v305 = vpop.f32.mrf.mxu0
  %306 = vmatprep.mubr.f32.mxu0 0.0
  %307 = vmatmul.mubr.f32.gmra.mxu0 %v111
  %v308 = vpop.f32.mrf.mxu0
  %v309 = vadd.f32 %v53, %v308
  %v310 = vpop.f32.mrf.mxu0
  %311 = vmatprep.mubr.f32.mxu0 0.0
  %312 = vmatmul.mubr.f32.gmra.mxu0 %v114
  %v313 = vpop.f32.mrf.mxu0
  %v314 = vadd.f32 %v53, %v313
  %v315 = vpop.f32.mrf.mxu0
  %316 = vmatprep.mubr.f32.mxu0 0.0
  %317 = vmatmul.mubr.f32.gmra.mxu0 %v117
  %v318 = vpop.f32.mrf.mxu0
  %v319 = vadd.f32 %v53, %v318
  %v320 = vpop.f32.mrf.mxu0
  %321 = vmatprep.mubr.f32.mxu0 0.0
  %322 = vmatmul.mubr.f32.gmra.mxu0 %v120
  %v323 = vpop.f32.mrf.mxu0
  %v324 = vadd.f32 %v53, %v323
  %v325 = vpop.f32.mrf.mxu0
  %326 = vmatprep.mubr.f32.mxu0 0.0
  %327 = vmatmul.mubr.f32.gmra.mxu0 %v123
  %v328 = vpop.f32.mrf.mxu0
  %v329 = vadd.f32 %v53, %v328
  %v330 = vpop.f32.mrf.mxu0
  %331 = vmatprep.mubr.f32.mxu0 0.0
  %332 = vmatmul.mubr.f32.gmra.mxu0 %v126
  %v333 = vpop.f32.mrf.mxu0
  %v334 = vadd.f32 %v53, %v333
  %v335 = vpop.f32.mrf.mxu0
  %336 = vmatprep.mubr.f32.mxu0 0.0
  %337 = vmatmul.mubr.f32.gmra.mxu0 %v129
  %v338 = vpop.f32.mrf.mxu0
  %v339 = vadd.f32 %v53, %v338
  %v340 = vpop.f32.mrf.mxu0
  %341 = vmatprep.mubr.f32.mxu0 0.0
  %342 = vmatmul.mubr.f32.gmra.mxu0 %v132
  %v343 = vpop.f32.mrf.mxu0
  %v344 = vadd.f32 %v53, %v343
  %v345 = vpop.f32.mrf.mxu0
  %346 = vmatprep.mubr.f32.mxu0 0.0
  %347 = vmatmul.mubr.f32.gmra.mxu0 %v135
  %v348 = vpop.f32.mrf.mxu0
  %v349 = vadd.f32 %v53, %v348
  %v350 = vpop.f32.mrf.mxu0
  %351 = vmatprep.mubr.f32.mxu0 0.0
  %352 = vmatmul.mubr.f32.gmra.mxu0 %v138
  %v353 = vpop.f32.mrf.mxu0
  %v354 = vadd.f32 %v53, %v353
  %v355 = vpop.f32.mrf.mxu0
  %356 = vmatprep.mubr.f32.mxu0 0.0
  %357 = vmatmul.mubr.f32.gmra.mxu0 %v141
  %v358 = vpop.f32.mrf.mxu0
  %v359 = vadd.f32 %v53, %v358
  %v360 = vpop.f32.mrf.mxu0
  %361 = vmatprep.mubr.f32.mxu0 0.0
  %362 = vmatmul.mubr.f32.gmra.mxu0 %v144
  %v363 = vpop.f32.mrf.mxu0
  %v364 = vadd.f32 %v53, %v363
  %v365 = vpop.f32.mrf.mxu0
  %366 = vmatprep.mubr.f32.mxu0 0.0
  %367 = vmatmul.mubr.f32.gmra.mxu0 %v147
  %v368 = vpop.f32.mrf.mxu0
  %v369 = vadd.f32 %v53, %v368
  %v370 = vpop.f32.mrf.mxu0
  %371 = vmatprep.mubr.f32.mxu0 0.0
  %372 = vmatmul.mubr.f32.gmra.mxu0 %v150
  %v373 = vpop.f32.mrf.mxu0
  %v374 = vadd.f32 %v53, %v373
  %v375 = vpop.f32.mrf.mxu0
  %376 = vdwg.mxu0
  %377 = vmax.xlane.f32.xlu0 %v219
  %v378 = vpop.xlane.xlu0 %377
  %379 = vmax.xlane.f32.xlu0 %v224
  %v380 = vpop.xlane.xlu0 %379
  %381 = vmax.xlane.f32.xlu0 %v229
  %v382 = vpop.xlane.xlu0 %381
  %383 = vmax.xlane.f32.xlu0 %v234
  %v384 = vpop.xlane.xlu0 %383
  %385 = vmax.xlane.f32.xlu0 %v239
  %v386 = vpop.xlane.xlu0 %385
  %387 = vmax.xlane.f32.xlu0 %v244
  %v388 = vpop.xlane.xlu0 %387
  %389 = vmax.xlane.f32.xlu0 %v249
  %v390 = vpop.xlane.xlu0 %389
  %391 = vmax.xlane.f32.xlu0 %v254
  %v392 = vpop.xlane.xlu0 %391
  %393 = vmax.xlane.f32.xlu0 %v259
  %v394 = vpop.xlane.xlu0 %393
  %395 = vmax.xlane.f32.xlu0 %v264
  %v396 = vpop.xlane.xlu0 %395
  %397 = vmax.xlane.f32.xlu0 %v269
  %v398 = vpop.xlane.xlu0 %397
  %399 = vmax.xlane.f32.xlu0 %v274
  %v400 = vpop.xlane.xlu0 %399
  %401 = vmax.xlane.f32.xlu0 %v279
  %v402 = vpop.xlane.xlu0 %401
  %403 = vmax.xlane.f32.xlu0 %v284
  %v404 = vpop.xlane.xlu0 %403
  %405 = vmax.xlane.f32.xlu0 %v289
  %v406 = vpop.xlane.xlu0 %405
  %407 = vmax.xlane.f32.xlu0 %v294
  %v408 = vpop.xlane.xlu0 %407
  %409 = vmax.xlane.f32.xlu0 %v299
  %v410 = vpop.xlane.xlu0 %409
  %411 = vmax.xlane.f32.xlu0 %v304
  %v412 = vpop.xlane.xlu0 %411
  %413 = vmax.xlane.f32.xlu0 %v309
  %v414 = vpop.xlane.xlu0 %413
  %415 = vmax.xlane.f32.xlu0 %v314
  %v416 = vpop.xlane.xlu0 %415
  %417 = vmax.xlane.f32.xlu0 %v319
  %v418 = vpop.xlane.xlu0 %417
  %419 = vmax.xlane.f32.xlu0 %v324
  %v420 = vpop.xlane.xlu0 %419
  %421 = vmax.xlane.f32.xlu0 %v329
  %v422 = vpop.xlane.xlu0 %421
  %423 = vmax.xlane.f32.xlu0 %v334
  %v424 = vpop.xlane.xlu0 %423
  %425 = vmax.xlane.f32.xlu0 %v339
  %v426 = vpop.xlane.xlu0 %425
  %427 = vmax.xlane.f32.xlu0 %v344
  %v428 = vpop.xlane.xlu0 %427
  %429 = vmax.xlane.f32.xlu0 %v349
  %v430 = vpop.xlane.xlu0 %429
  %431 = vmax.xlane.f32.xlu0 %v354
  %v432 = vpop.xlane.xlu0 %431
  %433 = vmax.xlane.f32.xlu0 %v359
  %v434 = vpop.xlane.xlu0 %433
  %435 = vmax.xlane.f32.xlu0 %v364
  %v436 = vpop.xlane.xlu0 %435
  %437 = vmax.xlane.f32.xlu0 %v369
  %v438 = vpop.xlane.xlu0 %437
  %439 = vmax.xlane.f32.xlu0 %v374
  %v440 = vpop.xlane.xlu0 %439
  %v441 = vsub.f32 %v219, %v378
  %v442 = vsub.f32 %v224, %v380
  %v443 = vsub.f32 %v229, %v382
  %v444 = vsub.f32 %v234, %v384
  %v445 = vsub.f32 %v239, %v386
  %v446 = vsub.f32 %v244, %v388
  %v447 = vsub.f32 %v249, %v390
  %v448 = vsub.f32 %v254, %v392
  %v449 = vsub.f32 %v259, %v394
  %v450 = vsub.f32 %v264, %v396
  %v451 = vsub.f32 %v269, %v398
  %v452 = vsub.f32 %v274, %v400
  %v453 = vsub.f32 %v279, %v402
  %v454 = vsub.f32 %v284, %v404
  %v455 = vsub.f32 %v289, %v406
  %v456 = vsub.f32 %v294, %v408
  %v457 = vsub.f32 %v299, %v410
  %v458 = vsub.f32 %v304, %v412
  %v459 = vsub.f32 %v309, %v414
  %v460 = vsub.f32 %v314, %v416
  %v461 = vsub.f32 %v319, %v418
  %v462 = vsub.f32 %v324, %v420
  %v463 = vsub.f32 %v329, %v422
  %v464 = vsub.f32 %v334, %v424
  %v465 = vsub.f32 %v339, %v426
  %v466 = vsub.f32 %v344, %v428
  %v467 = vsub.f32 %v349, %v430
  %v468 = vsub.f32 %v354, %v432
  %v469 = vsub.f32 %v359, %v434
  %v470 = vsub.f32 %v364, %v436
  %v471 = vsub.f32 %v369, %v438
  %v472 = vsub.f32 %v374, %v440
  %v473 = vmul.f32 %v441, 1.442695
  %v474 = vpow.pop %v473
  %v475 = vmul.f32 %v442, 1.442695
  %v476 = vpow.pop %v475
  %v477 = vmul.f32 %v443, 1.442695
  %v478 = vpow.pop %v477
  %v479 = vmul.f32 %v444, 1.442695
  %v480 = vpow.pop %v479
  %v481 = vmul.f32 %v445, 1.442695
  %v482 = vpow.pop %v481
  %v483 = vmul.f32 %v446, 1.442695
  %v484 = vpow.pop %v483
  %v485 = vmul.f32 %v447, 1.442695
  %v486 = vpow.pop %v485
  %v487 = vmul.f32 %v448, 1.442695
  %v488 = vpow.pop %v487
  %v489 = vmul.f32 %v449, 1.442695
  %v490 = vpow.pop %v489
  %v491 = vmul.f32 %v450, 1.442695
  %v492 = vpow.pop %v491
  %v493 = vmul.f32 %v451, 1.442695
  %v494 = vpow.pop %v493
  %v495 = vmul.f32 %v452, 1.442695
  %v496 = vpow.pop %v495
  %v497 = vmul.f32 %v453, 1.442695
  %v498 = vpow.pop %v497
  %v499 = vmul.f32 %v454, 1.442695
  %v500 = vpow.pop %v499
  %v501 = vmul.f32 %v455, 1.442695
  %v502 = vpow.pop %v501
  %v503 = vmul.f32 %v456, 1.442695
  %v504 = vpow.pop %v503
  %v505 = vmul.f32 %v457, 1.442695
  %v506 = vpow.pop %v505
  %v507 = vmul.f32 %v458, 1.442695
  %v508 = vpow.pop %v507
  %v509 = vmul.f32 %v459, 1.442695
  %v510 = vpow.pop %v509
  %v511 = vmul.f32 %v460, 1.442695
  %v512 = vpow.pop %v511
  %v513 = vmul.f32 %v461, 1.442695
  %v514 = vpow.pop %v513
  %v515 = vmul.f32 %v462, 1.442695
  %v516 = vpow.pop %v515
  %v517 = vmul.f32 %v463, 1.442695
  %v518 = vpow.pop %v517
  %v519 = vmul.f32 %v464, 1.442695
  %v520 = vpow.pop %v519
  %v521 = vmul.f32 %v465, 1.442695
  %v522 = vpow.pop %v521
  %v523 = vmul.f32 %v466, 1.442695
  %v524 = vpow.pop %v523
  %v525 = vmul.f32 %v467, 1.442695
  %v526 = vpow.pop %v525
  %v527 = vmul.f32 %v468, 1.442695
  %v528 = vpow.pop %v527
  %v529 = vmul.f32 %v469, 1.442695
  %v530 = vpow.pop %v529
  %v531 = vmul.f32 %v470, 1.442695
  %v532 = vpow.pop %v531
  %v533 = vmul.f32 %v471, 1.442695
  %v534 = vpow.pop %v533
  %v535 = vmul.f32 %v472, 1.442695
  %v536 = vpow.pop %v535
  %537 = vadd.xlane.f32.xlu0 %v474
  %v538 = vpop.xlane.xlu0 %537
  %539 = vadd.xlane.f32.xlu0 %v476
  %v540 = vpop.xlane.xlu0 %539
  %541 = vadd.xlane.f32.xlu0 %v478
  %v542 = vpop.xlane.xlu0 %541
  %543 = vadd.xlane.f32.xlu0 %v480
  %v544 = vpop.xlane.xlu0 %543
  %545 = vadd.xlane.f32.xlu0 %v482
  %v546 = vpop.xlane.xlu0 %545
  %547 = vadd.xlane.f32.xlu0 %v484
  %v548 = vpop.xlane.xlu0 %547
  %549 = vadd.xlane.f32.xlu0 %v486
  %v550 = vpop.xlane.xlu0 %549
  %551 = vadd.xlane.f32.xlu0 %v488
  %v552 = vpop.xlane.xlu0 %551
  %553 = vadd.xlane.f32.xlu0 %v490
  %v554 = vpop.xlane.xlu0 %553
  %555 = vadd.xlane.f32.xlu0 %v492
  %v556 = vpop.xlane.xlu0 %555
  %557 = vadd.xlane.f32.xlu0 %v494
  %v558 = vpop.xlane.xlu0 %557
  %559 = vadd.xlane.f32.xlu0 %v496
  %v560 = vpop.xlane.xlu0 %559
  %561 = vadd.xlane.f32.xlu0 %v498
  %v562 = vpop.xlane.xlu0 %561
  %563 = vadd.xlane.f32.xlu0 %v500
  %v564 = vpop.xlane.xlu0 %563
  %565 = vadd.xlane.f32.xlu0 %v502
  %v566 = vpop.xlane.xlu0 %565
  %567 = vadd.xlane.f32.xlu0 %v504
  %v568 = vpop.xlane.xlu0 %567
  %569 = vadd.xlane.f32.xlu0 %v506
  %v570 = vpop.xlane.xlu0 %569
  %571 = vadd.xlane.f32.xlu0 %v508
  %v572 = vpop.xlane.xlu0 %571
  %573 = vadd.xlane.f32.xlu0 %v510
  %v574 = vpop.xlane.xlu0 %573
  %575 = vadd.xlane.f32.xlu0 %v512
  %v576 = vpop.xlane.xlu0 %575
  %577 = vadd.xlane.f32.xlu0 %v514
  %v578 = vpop.xlane.xlu0 %577
  %579 = vadd.xlane.f32.xlu0 %v516
  %v580 = vpop.xlane.xlu0 %579
  %581 = vadd.xlane.f32.xlu0 %v518
  %v582 = vpop.xlane.xlu0 %581
  %583 = vadd.xlane.f32.xlu0 %v520
  %v584 = vpop.xlane.xlu0 %583
  %585 = vadd.xlane.f32.xlu0 %v522
  %v586 = vpop.xlane.xlu0 %585
  %587 = vadd.xlane.f32.xlu0 %v524
  %v588 = vpop.xlane.xlu0 %587
  %589 = vadd.xlane.f32.xlu0 %v526
  %v590 = vpop.xlane.xlu0 %589
  %591 = vadd.xlane.f32.xlu0 %v528
  %v592 = vpop.xlane.xlu0 %591
  %593 = vadd.xlane.f32.xlu0 %v530
  %v594 = vpop.xlane.xlu0 %593
  %595 = vadd.xlane.f32.xlu0 %v532
  %v596 = vpop.xlane.xlu0 %595
  %597 = vadd.xlane.f32.xlu0 %v534
  %v598 = vpop.xlane.xlu0 %597
  %599 = vadd.xlane.f32.xlu0 %v536
  %v600 = vpop.xlane.xlu0 %599
  %v601 = vrcp.pop %v538
  %v602 = vrcp.pop %v540
  %v603 = vrcp.pop %v542
  %v604 = vrcp.pop %v544
  %v605 = vrcp.pop %v546
  %v606 = vrcp.pop %v548
  %v607 = vrcp.pop %v550
  %v608 = vrcp.pop %v552
  %v609 = vrcp.pop %v554
  %v610 = vrcp.pop %v556
  %v611 = vrcp.pop %v558
  %v612 = vrcp.pop %v560
  %v613 = vrcp.pop %v562
  %v614 = vrcp.pop %v564
  %v615 = vrcp.pop %v566
  %v616 = vrcp.pop %v568
  %v617 = vrcp.pop %v570
  %v618 = vrcp.pop %v572
  %v619 = vrcp.pop %v574
  %v620 = vrcp.pop %v576
  %v621 = vrcp.pop %v578
  %v622 = vrcp.pop %v580
  %v623 = vrcp.pop %v582
  %v624 = vrcp.pop %v584
  %v625 = vrcp.pop %v586
  %v626 = vrcp.pop %v588
  %v627 = vrcp.pop %v590
  %v628 = vrcp.pop %v592
  %v629 = vrcp.pop %v594
  %v630 = vrcp.pop %v596
  %v631 = vrcp.pop %v598
  %v632 = vrcp.pop %v600
  %v633 = vmul.f32 %v474, %v601
  %v634 = vmul.f32 %v476, %v602
  %v635 = vmul.f32 %v478, %v603
  %v636 = vmul.f32 %v480, %v604
  %v637 = vmul.f32 %v482, %v605
  %v638 = vmul.f32 %v484, %v606
  %v639 = vmul.f32 %v486, %v607
  %v640 = vmul.f32 %v488, %v608
  %v641 = vmul.f32 %v490, %v609
  %v642 = vmul.f32 %v492, %v610
  %v643 = vmul.f32 %v494, %v611
  %v644 = vmul.f32 %v496, %v612
  %v645 = vmul.f32 %v498, %v613
  %v646 = vmul.f32 %v500, %v614
  %v647 = vmul.f32 %v502, %v615
  %v648 = vmul.f32 %v504, %v616
  %v649 = vmul.f32 %v506, %v617
  %v650 = vmul.f32 %v508, %v618
  %v651 = vmul.f32 %v510, %v619
  %v652 = vmul.f32 %v512, %v620
  %v653 = vmul.f32 %v514, %v621
  %v654 = vmul.f32 %v516, %v622
  %v655 = vmul.f32 %v518, %v623
  %v656 = vmul.f32 %v520, %v624
  %v657 = vmul.f32 %v522, %v625
  %v658 = vmul.f32 %v524, %v626
  %v659 = vmul.f32 %v526, %v627
  %v660 = vmul.f32 %v528, %v628
  %v661 = vmul.f32 %v530, %v629
  %v662 = vmul.f32 %v532, %v630
  %v663 = vmul.f32 %v534, %v631
  %v664 = vmul.f32 %v536, %v632
  %665 = vst [vmem:[%s3] sm:$0xff] %v633
  %666 = vst [vmem:[%s3 + $0x8] sm:$0xff] %v634
  %667 = vst [vmem:[%s3 + $0x10] sm:$0xff] %v635
  %668 = vst [vmem:[%s3 + $0x18] sm:$0xff] %v636
  %669 = vst [vmem:[%s3 + $0x20] sm:$0xff] %v637
  %670 = vst [vmem:[%s3 + $0x28] sm:$0xff] %v638
  %671 = vst [vmem:[%s3 + $0x30] sm:$0xff] %v639
  %672 = vst [vmem:[%s3 + $0x38] sm:$0xff] %v640
  %673 = vst [vmem:[%s3 + $0x40] sm:$0xff] %v641
  %674 = vst [vmem:[%s3 + $0x48] sm:$0xff] %v642
  %675 = vst [vmem:[%s3 + $0x50] sm:$0xff] %v643
  %676 = vst [vmem:[%s3 + $0x58] sm:$0xff] %v644
  %677 = vst [vmem:[%s3 + $0x60] sm:$0xff] %v645
  %678 = vst [vmem:[%s3 + $0x68] sm:$0xff] %v646
  %679 = vst [vmem:[%s3 + $0x70] sm:$0xff] %v647
  %680 = vst [vmem:[%s3 + $0x78] sm:$0xff] %v648
  %681 = vst [vmem:[%s3 + $0x80] sm:$0xff] %v649
  %682 = vst [vmem:[%s3 + $0x88] sm:$0xff] %v650
  %683 = vst [vmem:[%s3 + $0x90] sm:$0xff] %v651
  %684 = vst [vmem:[%s3 + $0x98] sm:$0xff] %v652
  %685 = vst [vmem:[%s3 + $0xa0] sm:$0xff] %v653
  %686 = vst [vmem:[%s3 + $0xa8] sm:$0xff] %v654
  %687 = vst [vmem:[%s3 + $0xb0] sm:$0xff] %v655
  %688 = vst [vmem:[%s3 + $0xb8] sm:$0xff] %v656
  %689 = vst [vmem:[%s3 + $0xc0] sm:$0xff] %v657
  %690 = vst [vmem:[%s3 + $0xc8] sm:$0xff] %v658
  %691 = vst [vmem:[%s3 + $0xd0] sm:$0xff] %v659
  %692 = vst [vmem:[%s3 + $0xd8] sm:$0xff] %v660
  %693 = vst [vmem:[%s3 + $0xe0] sm:$0xff] %v661
  %694 = vst [vmem:[%s3 + $0xe8] sm:$0xff] %v662
  %695 = vst [vmem:[%s3 + $0xf0] sm:$0xff] %v663
  %696 = vst [vmem:[%s3 + $0xf8] sm:$0xff] %v664
  // Predicated region
  $region14: #{policy_forward.1} parent=0 // pred_check
    _
  $region15: #{policy_forward.1} parent=0 // pred_check_branch
    %698 = sbr.rel (0) target = $region17
  $region16: #{policy_forward.1} parent=0 // pred_region
    _
  $region17: #{policy_forward.1} parent=0 // pred_fallthru
    _
  // Predicated region
  $region18: #{policy_forward.1} parent=0 // pred_check
    _
  $region19: #{policy_forward.1} parent=0 // pred_check_branch
    %700 = sbr.rel (0) target = $region21
  $region20: #{policy_forward.1} parent=0 // pred_region
    _
  $region21: #{policy_forward.1} parent=0 // pred_fallthru
    _

</llo_original>
